<compile_context>
chip_gen: v7x
topology: tpu7x:2x2x1
jax: 0.10.0
libtpu: 0.0.40
codegen_flags: <defaults>
</compile_context>

<pallas_src>
import jax
import jax.numpy as jnp
from jax.experimental import pallas as pl
from jax.experimental.pallas import tpu as pltpu


def disc_kernel(c_ref, w_ref, h1_ref, h2_ref, h3_ref, h4_ref, bias_ref, out_ref):
    # c_ref:    (1, n_h, 2) f32    columns = [c1, c2] for this batch element
    # w_ref:    (n_h, n_h)  f32    bilinear weight A (= torch weight[0])
    # h*_ref:   (1, TN, n_h)       node tile of h1..h4 (original dtype, streamed once)
    # bias_ref: (1,)        f32    scalar in SMEM
    # out_ref:  (1, 4, TN, 1) f32  rows = [sc_1, sc_2, sc_3, sc_4]

    # wc[i, k] = sum_j A[i, j] * c_k[j]   — tiny MXU matmul, f32 accumulate.
    wc = jnp.dot(w_ref[...], c_ref[0], preferred_element_type=jnp.float32)   # (n_h, 2)
    # Match operand dtype of the streamed h (bf16 upstream stays bf16; f32 stays f32).
    wc_rhs = wc if h1_ref.dtype == jnp.float32 else wc.astype(h1_ref.dtype)
    bias = bias_ref[0]

    # torch.cat order: sc_1=f_k(h2,c1), sc_2=f_k(h1,c2), sc_3=f_k(h4,c1), sc_4=f_k(h3,c2)
    pairs = ((h2_ref, 0), (h1_ref, 1), (h4_ref, 0), (h3_ref, 1))
    for row, (h_ref, col) in enumerate(pairs):
        # MXU contraction of the raw h block; no f32 copy of h is materialized.
        s2 = jnp.dot(h_ref[0], wc_rhs, preferred_element_type=jnp.float32)   # (TN, 2)
        out_ref[0, row] = s2[:, col:col + 1] + bias                          # (TN, 1)


def _working_set_bytes(tn, n_h, h_itemsize):
    """Per-grid-step VMEM estimate (double-buffered blocks + f32 intermediates)."""
    h_blk = 4 * tn * n_h * h_itemsize        # four h input blocks
    out_blk = 4 * tn * 4                     # (4, TN, 1) f32 output block
    resident = (n_h * 2 + n_h * n_h) * 4     # c pair + W (constant index_map)
    interm = 4 * tn * 2 * 4 + n_h * 2 * 4    # f32 dot results + wc
    return 2 * (h_blk + out_blk + resident) + interm


def _round8_up(x):
    return ((x + 7) // 8) * 8


def _choose_node_tile(B, N, n_h, h_itemsize, vmem_budget, max_tile=2048):
    # Largest node tile (multiple of 8, or == N) whose working set fits the budget.
    tn = N if N <= max_tile else (max_tile // 8) * 8
    while tn > 8 and _working_set_bytes(tn, n_h, h_itemsize) > vmem_budget:
        tn = max(8, ((tn // 2) // 8) * 8)
    # v7x has 2 TensorCores per chip: keep >= 2 grid steps so "parallel" can shard.
    if B * ((N + tn - 1) // tn) < 2 and N >= 16:
        tn = _round8_up((N + 1) // 2)
    return tn


def discriminator_forward(c1, c2, h1, h2, h3, h4, weight, bias, *, node_tile=None):
    """c1, c2: (B, n_h); h1..h4: (B, N, n_h) (f32 or bf16, used as-is);
       weight: (1, n_h, n_h) torch nn.Bilinear weight; bias: (1,).
       Returns logits (B, 4N) = cat([sc1, sc2, sc3, sc4], axis=1)."""
    B, N, n_h = h1.shape

    # Tiny wrapper-side plumbing only (no pass over the big h tensors).
    c_pair = jnp.stack([c1, c2], axis=-1).astype(jnp.float32)        # (B, n_h, 2)
    w2d = jnp.asarray(weight, jnp.float32).reshape(n_h, n_h)         # (n_h, n_h)
    bias1 = jnp.asarray(bias, jnp.float32).reshape(1)                # scalar -> SMEM

    # Per-generation VMEM budget (v5e/v6e: 128 MiB, v7x: 64 MiB) minus headroom.
    try:
        vmem_cap = int(pltpu.get_tpu_info().vmem_capacity_bytes)
    except Exception:
        vmem_cap = 64 * 1024 * 1024
    vmem_budget = max(16 * 1024 * 1024, vmem_cap - (16 << 20))

    h_itemsize = jnp.dtype(h1.dtype).itemsize
    tn = node_tile if node_tile is not None else _choose_node_tile(
        B, N, n_h, h_itemsize, vmem_budget)
    n_tiles = (N + tn - 1) // tn   # ceil-div; partial last tile is masked by Pallas

    ws = _working_set_bytes(tn, n_h, h_itemsize)
    vmem_limit = int(min(vmem_budget, max(32 * 1024 * 1024, ws + (4 << 20))))

    h_spec = pl.BlockSpec((1, tn, n_h), lambda b, t: (b, t, 0))
    out = pl.pallas_call(
        disc_kernel,
        out_shape=jax.ShapeDtypeStruct((B, 4, N, 1), jnp.float32),
        grid_spec=pltpu.PrefetchScalarGridSpec(
            num_scalar_prefetch=0,
            grid=(B, n_tiles),
            in_specs=[
                pl.BlockSpec((1, n_h, 2), lambda b, t: (b, 0, 0)),   # c pair (resident)
                pl.BlockSpec((n_h, n_h), lambda b, t: (0, 0)),       # W (resident)
                h_spec, h_spec, h_spec, h_spec,                      # h1..h4 streamed
                pl.BlockSpec(memory_space=pltpu.MemorySpace.SMEM),   # bias scalar
            ],
            out_specs=pl.BlockSpec((1, 4, tn, 1), lambda b, t: (b, 0, t, 0)),
        ),
        compiler_params=pltpu.CompilerParams(
            dimension_semantics=("parallel", "parallel"),
            vmem_limit_bytes=vmem_limit,
        ),
    )(c_pair, w2d, h1, h2, h3, h4, bias1)

    # (B, 4, N, 1) -> (B, 4N) reproduces torch.cat((sc_1, sc_2, sc_3, sc_4), dim=1).
    return out.reshape(B, 4 * N)


def discriminator_reference(c1, c2, h1, h2, h3, h4, weight, bias):
    """Pure-JAX f32 reference mirroring the PyTorch forward."""
    n_h = c1.shape[-1]
    W = jnp.asarray(weight, jnp.float32).reshape(n_h, n_h)
    b = jnp.asarray(bias, jnp.float32).reshape(())

    def bil(h, c):  # (B, N, n_h), (B, n_h) -> (B, N)
        return jnp.einsum("bni,ij,bj->bn", h.astype(jnp.float32), W,
                          c.astype(jnp.float32)) + b

    sc1 = bil(h2, c1)
    sc2 = bil(h1, c2)
    sc3 = bil(h4, c1)
    sc4 = bil(h3, c2)
    return jnp.concatenate([sc1, sc2, sc3, sc4], axis=1)


if __name__ == "__main__":
    key = jax.random.PRNGKey(0)

    # ---- Test 1: small module-consistent shapes (bias = 0 per nn.Bilinear init) ----
    B, N, n_h = 2, 8, 32
    ks = jax.random.split(key, 8)
    c1 = jax.random.normal(ks[0], (B, n_h), jnp.float32)
    c2 = jax.random.normal(ks[1], (B, n_h), jnp.float32)
    h1 = jax.random.normal(ks[2], (B, N, n_h), jnp.float32)
    h2 = jax.random.normal(ks[3], (B, N, n_h), jnp.float32)
    h3 = jax.random.normal(ks[4], (B, N, n_h), jnp.float32)
    h4 = jax.random.normal(ks[5], (B, N, n_h), jnp.float32)

    # nn.Bilinear(n_h, n_h, 1): weight (1, n_h, n_h) xavier_uniform_, bias = 0.0
    fan_in, fan_out = n_h * n_h, 1 * n_h
    bound = (6.0 / (fan_in + fan_out)) ** 0.5
    weight = jax.random.uniform(ks[6], (1, n_h, n_h), jnp.float32,
                                minval=-bound, maxval=bound)
    bias = jnp.zeros((1,), jnp.float32)

    logits = discriminator_forward(c1, c2, h1, h2, h3, h4, weight, bias)
    logits = jax.block_until_ready(logits)
    assert logits.shape == (B, 4 * N)
    ref = discriminator_reference(c1, c2, h1, h2, h3, h4, weight, bias)
    assert jnp.allclose(logits, ref, atol=5e-3, rtol=5e-3), (
        float(jnp.max(jnp.abs(logits - ref))))

    # ---- Test 2: exercises node tiling, masked partial last tile, megacore split ----
    B2, N2, nh2 = 1, 200, 128
    ks2 = jax.random.split(ks[7], 8)
    c1b = jax.random.normal(ks2[0], (B2, nh2), jnp.float32)
    c2b = jax.random.normal(ks2[1], (B2, nh2), jnp.float32)
    h1b = jax.random.normal(ks2[2], (B2, N2, nh2), jnp.float32)
    h2b = jax.random.normal(ks2[3], (B2, N2, nh2), jnp.float32)
    h3b = jax.random.normal(ks2[4], (B2, N2, nh2), jnp.float32)
    h4b = jax.random.normal(ks2[5], (B2, N2, nh2), jnp.float32)
    bound2 = (6.0 / (nh2 * nh2 + nh2)) ** 0.5
    weight2 = jax.random.uniform(ks2[6], (1, nh2, nh2), jnp.float32,
                                 minval=-bound2, maxval=bound2)
    bias2 = jnp.full((1,), 0.1, jnp.float32)

    out2 = discriminator_forward(c1b, c2b, h1b, h2b, h3b, h4b, weight2, bias2)
    out2 = jax.block_until_ready(out2)
    assert out2.shape == (B2, 4 * N2)
    ref2 = discriminator_reference(c1b, c2b, h1b, h2b, h3b, h4b, weight2, bias2)
    assert jnp.allclose(out2, ref2, atol=3e-2, rtol=3e-2), (
        float(jnp.max(jnp.abs(out2 - ref2))))

    print("KERNEL_OK")
</pallas_src>

<mosaic_0001>
module attributes {stable_mosaic.version = 11 : i64} {
  func.func @disc_kernel(%arg0: i32, %arg1: i32, %arg2: memref<1x32x2xf32, #tpu.memory_space<vmem>>, %arg3: memref<32x32xf32, #tpu.memory_space<vmem>>, %arg4: memref<1x8x32xf32, #tpu.memory_space<vmem>>, %arg5: memref<1x8x32xf32, #tpu.memory_space<vmem>>, %arg6: memref<1x8x32xf32, #tpu.memory_space<vmem>>, %arg7: memref<1x8x32xf32, #tpu.memory_space<vmem>>, %arg8: memref<1xf32, #tpu.memory_space<smem>>, %arg9: memref<1x4x8x1xf32, #tpu.memory_space<vmem>>) attributes {dimension_semantics = [#tpu.dimension_semantics<parallel>, #tpu.dimension_semantics<parallel>], iteration_bounds = array<i64: 2, 1>, scalar_prefetch = 0 : i64, scratch_operands = 0 : i64, tpu.core_type = #tpu.core_type<tc>, window_params = [{transform_indices = @transform_0, window_bounds = array<i64: 1, 32, 2>}, {pipeline_mode = #tpu.pipeline_mode<synchronous>, transform_indices = @transform_1, window_bounds = array<i64: 32, 32>}, {transform_indices = @transform_2, window_bounds = array<i64: 1, 8, 32>}, {transform_indices = @transform_3, window_bounds = array<i64: 1, 8, 32>}, {transform_indices = @transform_4, window_bounds = array<i64: 1, 8, 32>}, {transform_indices = @transform_5, window_bounds = array<i64: 1, 8, 32>}, {transform_indices = @transform_6, window_bounds = array<i64: 1>}, {transform_indices = @transform_7, window_bounds = array<i64: 1, 4, 8, 1>}]} {
    %c0 = arith.constant 0 : index
    %c0_0 = arith.constant 0 : index
    %0 = vector.load %arg3[%c0, %c0_0] : memref<32x32xf32, #tpu.memory_space<vmem>>, vector<32x32xf32>
    %c0_1 = arith.constant 0 : index
    %c0_2 = arith.constant 0 : index
    %c0_3 = arith.constant 0 : index
    %1 = vector.load %arg2[%c0_1, %c0_2, %c0_3] : memref<1x32x2xf32, #tpu.memory_space<vmem>>, vector<1x32x2xf32>
    %2 = vector.shape_cast %1 : vector<1x32x2xf32> to vector<32x2xf32>
    %cst = arith.constant dense<0.000000e+00> : vector<32x2xf32>
    %3 = tpu.matmul %0, %2, %cst {dimension_numbers = #tpu.dot_dimension_numbers<[1], [0], [0], [1], [0, 0, 1, 1], [], []>} : vector<32x32xf32>, vector<32x2xf32>, vector<32x2xf32> -> vector<32x2xf32>
    %c0_4 = arith.constant 0 : index
    %4 = memref.load %arg8[%c0_4] : memref<1xf32, #tpu.memory_space<smem>>
    %c0_5 = arith.constant 0 : index
    %c0_6 = arith.constant 0 : index
    %c0_7 = arith.constant 0 : index
    %5 = vector.load %arg5[%c0_5, %c0_6, %c0_7] : memref<1x8x32xf32, #tpu.memory_space<vmem>>, vector<1x8x32xf32>
    %6 = vector.shape_cast %5 : vector<1x8x32xf32> to vector<8x32xf32>
    %cst_8 = arith.constant dense<0.000000e+00> : vector<8x2xf32>
    %7 = tpu.matmul %6, %3, %cst_8 {dimension_numbers = #tpu.dot_dimension_numbers<[1], [0], [0], [1], [0, 0, 1, 1], [], []>} : vector<8x32xf32>, vector<32x2xf32>, vector<8x2xf32> -> vector<8x2xf32>
    %8 = vector.extract_strided_slice %7 {offsets = [0, 0], sizes = [8, 1], strides = [1, 1]} : vector<8x2xf32> to vector<8x1xf32>
    %9 = vector.broadcast %4 : f32 to vector<8x1xf32>
    %10 = arith.addf %8, %9 : vector<8x1xf32>
    %c0_9 = arith.constant 0 : index
    %c0_10 = arith.constant 0 : index
    %c0_11 = arith.constant 0 : index
    %c0_12 = arith.constant 0 : index
    %11 = vector.load %arg9[%c0_9, %c0_10, %c0_11, %c0_12] : memref<1x4x8x1xf32, #tpu.memory_space<vmem>>, vector<1x1x8x1xf32>
    %12 = vector.shape_cast %11 : vector<1x1x8x1xf32> to vector<8x1xf32>
    %13 = vector.shape_cast %10 : vector<8x1xf32> to vector<1x1x8x1xf32>
    tpu.vector_store %arg9[%c0_9, %c0_10, %c0_11, %c0_12], %13 {strides = array<i32>} : memref<1x4x8x1xf32, #tpu.memory_space<vmem>>, vector<1x1x8x1xf32>,
    %c0_13 = arith.constant 0 : index
    %c0_14 = arith.constant 0 : index
    %c0_15 = arith.constant 0 : index
    %14 = vector.load %arg4[%c0_13, %c0_14, %c0_15] : memref<1x8x32xf32, #tpu.memory_space<vmem>>, vector<1x8x32xf32>
    %15 = vector.shape_cast %14 : vector<1x8x32xf32> to vector<8x32xf32>
    %cst_16 = arith.constant dense<0.000000e+00> : vector<8x2xf32>
    %16 = tpu.matmul %15, %3, %cst_16 {dimension_numbers = #tpu.dot_dimension_numbers<[1], [0], [0], [1], [0, 0, 1, 1], [], []>} : vector<8x32xf32>, vector<32x2xf32>, vector<8x2xf32> -> vector<8x2xf32>
    %17 = vector.extract_strided_slice %16 {offsets = [0, 1], sizes = [8, 1], strides = [1, 1]} : vector<8x2xf32> to vector<8x1xf32>
    %18 = vector.broadcast %4 : f32 to vector<8x1xf32>
    %19 = arith.addf %17, %18 : vector<8x1xf32>
    %c0_17 = arith.constant 0 : index
    %c1 = arith.constant 1 : index
    %c0_18 = arith.constant 0 : index
    %c0_19 = arith.constant 0 : index
    %20 = vector.load %arg9[%c0_17, %c1, %c0_18, %c0_19] : memref<1x4x8x1xf32, #tpu.memory_space<vmem>>, vector<1x1x8x1xf32>
    %21 = vector.shape_cast %20 : vector<1x1x8x1xf32> to vector<8x1xf32>
    %22 = vector.shape_cast %19 : vector<8x1xf32> to vector<1x1x8x1xf32>
    tpu.vector_store %arg9[%c0_17, %c1, %c0_18, %c0_19], %22 {strides = array<i32>} : memref<1x4x8x1xf32, #tpu.memory_space<vmem>>, vector<1x1x8x1xf32>,
    %c0_20 = arith.constant 0 : index
    %c0_21 = arith.constant 0 : index
    %c0_22 = arith.constant 0 : index
    %23 = vector.load %arg7[%c0_20, %c0_21, %c0_22] : memref<1x8x32xf32, #tpu.memory_space<vmem>>, vector<1x8x32xf32>
    %24 = vector.shape_cast %23 : vector<1x8x32xf32> to vector<8x32xf32>
    %cst_23 = arith.constant dense<0.000000e+00> : vector<8x2xf32>
    %25 = tpu.matmul %24, %3, %cst_23 {dimension_numbers = #tpu.dot_dimension_numbers<[1], [0], [0], [1], [0, 0, 1, 1], [], []>} : vector<8x32xf32>, vector<32x2xf32>, vector<8x2xf32> -> vector<8x2xf32>
    %26 = vector.extract_strided_slice %25 {offsets = [0, 0], sizes = [8, 1], strides = [1, 1]} : vector<8x2xf32> to vector<8x1xf32>
    %27 = vector.broadcast %4 : f32 to vector<8x1xf32>
    %28 = arith.addf %26, %27 : vector<8x1xf32>
    %c0_24 = arith.constant 0 : index
    %c2 = arith.constant 2 : index
    %c0_25 = arith.constant 0 : index
    %c0_26 = arith.constant 0 : index
    %29 = vector.load %arg9[%c0_24, %c2, %c0_25, %c0_26] : memref<1x4x8x1xf32, #tpu.memory_space<vmem>>, vector<1x1x8x1xf32>
    %30 = vector.shape_cast %29 : vector<1x1x8x1xf32> to vector<8x1xf32>
    %31 = vector.shape_cast %28 : vector<8x1xf32> to vector<1x1x8x1xf32>
    tpu.vector_store %arg9[%c0_24, %c2, %c0_25, %c0_26], %31 {strides = array<i32>} : memref<1x4x8x1xf32, #tpu.memory_space<vmem>>, vector<1x1x8x1xf32>,
    %c0_27 = arith.constant 0 : index
    %c0_28 = arith.constant 0 : index
    %c0_29 = arith.constant 0 : index
    %32 = vector.load %arg6[%c0_27, %c0_28, %c0_29] : memref<1x8x32xf32, #tpu.memory_space<vmem>>, vector<1x8x32xf32>
    %33 = vector.shape_cast %32 : vector<1x8x32xf32> to vector<8x32xf32>
    %cst_30 = arith.constant dense<0.000000e+00> : vector<8x2xf32>
    %34 = tpu.matmul %33, %3, %cst_30 {dimension_numbers = #tpu.dot_dimension_numbers<[1], [0], [0], [1], [0, 0, 1, 1], [], []>} : vector<8x32xf32>, vector<32x2xf32>, vector<8x2xf32> -> vector<8x2xf32>
    %35 = vector.extract_strided_slice %34 {offsets = [0, 1], sizes = [8, 1], strides = [1, 1]} : vector<8x2xf32> to vector<8x1xf32>
    %36 = vector.broadcast %4 : f32 to vector<8x1xf32>
    %37 = arith.addf %35, %36 : vector<8x1xf32>
    %c0_31 = arith.constant 0 : index
    %c3 = arith.constant 3 : index
    %c0_32 = arith.constant 0 : index
    %c0_33 = arith.constant 0 : index
    %38 = vector.load %arg9[%c0_31, %c3, %c0_32, %c0_33] : memref<1x4x8x1xf32, #tpu.memory_space<vmem>>, vector<1x1x8x1xf32>
    %39 = vector.shape_cast %38 : vector<1x1x8x1xf32> to vector<8x1xf32>
    %40 = vector.shape_cast %37 : vector<8x1xf32> to vector<1x1x8x1xf32>
    tpu.vector_store %arg9[%c0_31, %c3, %c0_32, %c0_33], %40 {strides = array<i32>} : memref<1x4x8x1xf32, #tpu.memory_space<vmem>>, vector<1x1x8x1xf32>,
    return
  }
  func.func @transform_0(%arg0: i32, %arg1: i32) -> (i32, i32, i32) {
    %c0_i32 = arith.constant 0 : i32
    %c0_i32_0 = arith.constant 0 : i32
    %c0_i32_1 = arith.constant 0 : i32
    return %arg0, %c0_i32, %c0_i32_0 : i32, i32, i32
  }
  func.func @transform_1(%arg0: i32, %arg1: i32) -> (i32, i32) {
    %c0_i32 = arith.constant 0 : i32
    %c0_i32_0 = arith.constant 0 : i32
    %c0_i32_1 = arith.constant 0 : i32
    return %c0_i32, %c0_i32_0 : i32, i32
  }
  func.func @transform_2(%arg0: i32, %arg1: i32) -> (i32, i32, i32) {
    %c0_i32 = arith.constant 0 : i32
    %c0_i32_0 = arith.constant 0 : i32
    return %arg0, %arg1, %c0_i32 : i32, i32, i32
  }
  func.func @transform_3(%arg0: i32, %arg1: i32) -> (i32, i32, i32) {
    %c0_i32 = arith.constant 0 : i32
    %c0_i32_0 = arith.constant 0 : i32
    return %arg0, %arg1, %c0_i32 : i32, i32, i32
  }
  func.func @transform_4(%arg0: i32, %arg1: i32) -> (i32, i32, i32) {
    %c0_i32 = arith.constant 0 : i32
    %c0_i32_0 = arith.constant 0 : i32
    return %arg0, %arg1, %c0_i32 : i32, i32, i32
  }
  func.func @transform_5(%arg0: i32, %arg1: i32) -> (i32, i32, i32) {
    %c0_i32 = arith.constant 0 : i32
    %c0_i32_0 = arith.constant 0 : i32
    return %arg0, %arg1, %c0_i32 : i32, i32, i32
  }
  func.func @transform_6(%arg0: i32, %arg1: i32) -> i32 {
    %c0_i32 = arith.constant 0 : i32
    %c0_i32_0 = arith.constant 0 : i32
    return %c0_i32 : i32
  }
  func.func @transform_7(%arg0: i32, %arg1: i32) -> (i32, i32, i32, i32) {
    %c0_i32 = arith.constant 0 : i32
    %c0_i32_0 = arith.constant 0 : i32
    %c0_i32_1 = arith.constant 0 : i32
    return %arg0, %c0_i32, %arg1, %c0_i32_0 : i32, i32, i32, i32
  }
}

</mosaic_0001>

<llo_original>
// kernel: tpu_custom_call.1
$region0: #{tpu_custom_call.1}
  #allocation0 [shape = 'u32[]', space=smem, size = 0x4, offset = 0x4, fixed_abs, tag = 'smem constant byte address 0x4 - core index']
  #allocation1 [shape = 'u32[144,128]{1,0:T(1,128)}', space=vmem, size = 0x12000, scoped, tag = 'internal scratch']
  #allocation2 [shape = 'f32[1]{0:T(128)S(6)}', space=smem, size = 0x200, scoped, tag = 'scoped memory for tpu_custom_call.1']
  %s0 = inlined_call_operand.vmem [shape: f32[2,32,2], index: 0, kind: input, shape index: {}]
  %s1 = inlined_call_operand.vmem [shape: f32[32,32], index: 1, kind: input, shape index: {}]
  %s2 = inlined_call_operand.vmem [shape: f32[2,8,32], index: 2, kind: input, shape index: {}]
  %s3 = inlined_call_operand.vmem [shape: f32[2,8,32], index: 3, kind: input, shape index: {}]
  %s4 = inlined_call_operand.vmem [shape: f32[2,8,32], index: 4, kind: input, shape index: {}]
  %s5 = inlined_call_operand.hbm [shape: f32[2,8,32], index: 5, kind: input, shape index: {}]
  %s6 = inlined_call_operand.<no memory space> [shape: f32[1], index: 6, kind: input, shape index: {}]
  %s7 = inlined_call_operand.vmem [shape: f32[2,4,8,1], index: 7, kind: output, shape index: {}]
  %s8 = sld [smem:[#allocation0]]
  $region65: #{tpu_custom_call.1} parent=0
    _
  %s10 = ssub.s32 1, %s8
  %s11 = scalar_select 0, %s10, %s8
  %12 = sst [smem:[#allocation2]] %s6
  $region1: #{tpu_custom_call.1} parent=0
    #allocation3 [shape = 'u8[8192]{0}', space=vmem, size = 0x2000, scoped, tag = 'input window, operand 5']
    #allocation4 [shape = 's32[2]{0}', space=sflag, size = 0x8, scoped, tag = 'scoped memory for tpu_custom_call.1']
    %13 = vsyncpa [#allocation4], 0
    %s14 = scalar_lea.sflag [#allocation4], 1
    %15 = vsyncpa %s14, 0
    loop: start=0, step=1, limit=4
    $region2: #{tpu_custom_call.1} parent=1 // loop_pre_header
      _
    $region3: #{tpu_custom_call.1} parent=1 // loop_header
      %s17 = sphi 0, %s21
      %p18 = scmp.ge.s32.totalorder %s17, 4
      %s24 = sphi 0, %s36
      %s25 = sphi 0, %s32
      %s26 = sphi 0, %s24
      %s27 = sphi 0, %s25
      %s28 = sphi 0, %s26
      %s29 = sphi 0, %s27
      %s39 = sphi 0, %s41
      %s42 = sphi 0, %s39
      %s43 = sphi 0, %s42
      %s59 = sphi 0, %s43
      %s63 = sphi 0, %s63
      %s65 = sphi 0, %s63
      %s66 = sphi 0, %s65
      %s80 = sphi 0, %s66
      %s88 = sphi 0, %s90
      %s91 = sphi 0, %s88
      %s92 = sphi 0, %s91
      %s108 = sphi 0, %s92
      %s116 = sphi 0, %s118
      %s119 = sphi 0, %s116
      %s120 = sphi 0, %s119
      %s136 = sphi 0, %s120
      %s144 = sphi 0, %s146
      %s147 = sphi 0, %s144
      %s148 = sphi 0, %s147
      %s164 = sphi 0, %s148
      %s172 = sphi 0, %s174
      %s175 = sphi 0, %s172
      %s176 = sphi 0, %s175
      %s192 = sphi 0, %s176
      %s196 = sphi 0, %s196
      %s198 = sphi 0, %s196
      %s199 = sphi 0, %s198
      %s213 = sphi 0, %s199
      %s221 = sphi 0, %s223
      %s224 = sphi 0, %s221
      %s225 = sphi 0, %s224
      %s241 = sphi 0, %s225
    $region4: #{tpu_custom_call.1} parent=1 // loop_header_branch
      %20 = sbr.rel (%p18) target = $region8
    $region5: #{tpu_custom_call.1} parent=1 // loop_body
      %s22 = ssub.s32 %s17, 1
      %s23 = ssub.s32 %s17, 2
      %s30 = sadd.s32 1, %s25
      %p31 = scmp.ge.s32.totalorder %s30, 1
      %s32 = scalar_select %p31, 0, %s30
      %s33 = sadd.s32 1, %s24
      %s34 = scalar_select %p31, %s33, %s24
      %p35 = scmp.ge.s32.totalorder %s34, 2
      %s36 = scalar_select %p35, 0, %s34
      %s37 = ssub.s32 %s24, %s36
      %p38 = scmp.eq.s32.totalorder %s37, 0
      %s40 = sadd.s32 %s39, 1
      %s41 = scalar_select %p38, %s39, %s40
      %p44 = pneg %p38
      %p45 = scmp.eq.s32.totalorder %s17, 1
      %p46 = por %p44, %p45
      %p47 = scmp.ne.s32.totalorder %s39, %s42
      %p48 = scmp.eq.s32.totalorder %s17, 0
      %p49 = por %p47, %p48
      %p50 = scmp.ne.s32.totalorder %s39, %s42
      %p51 = scmp.eq.s32.totalorder %s22, 1
      %p52 = por %p50, %p51
      %p53 = scmp.ne.s32.totalorder %s42, %s43
      %p54 = scmp.eq.s32.totalorder %s22, 0
      %p55 = por %p53, %p54
      %p56 = scmp.ne.s32.totalorder %s42, %s43
      %p57 = scmp.eq.s32.totalorder %s23, 1
      %p58 = por %p56, %p57
      %p60 = scmp.ne.s32.totalorder %s43, %s59
      %p61 = scmp.eq.s32.totalorder %s23, 0
      %p62 = por %p60, %p61
      %s64 = sadd.s32 %s63, 1
      %p67 = scmp.eq.s32.totalorder %s17, 1
      %p68 = scmp.ne.s32.totalorder %s63, %s65
      %p69 = scmp.eq.s32.totalorder %s17, 0
      %p70 = por %p68, %p69
      %p71 = scmp.ne.s32.totalorder %s63, %s65
      %p72 = scmp.eq.s32.totalorder %s22, 1
      %p73 = por %p71, %p72
      %p74 = scmp.ne.s32.totalorder %s65, %s66
      %p75 = scmp.eq.s32.totalorder %s22, 0
      %p76 = por %p74, %p75
      %p77 = scmp.ne.s32.totalorder %s65, %s66
      %p78 = scmp.eq.s32.totalorder %s23, 1
      %p79 = por %p77, %p78
      %p81 = scmp.ne.s32.totalorder %s66, %s80
      %p82 = scmp.eq.s32.totalorder %s23, 0
      %p83 = por %p81, %p82
      %s84 = ssub.s32 %s24, %s36
      %s85 = ssub.s32 %s25, %s32
      %s86 = sor.u32 %s84, %s85
      %p87 = scmp.eq.s32.totalorder %s86, 0
      %s89 = sadd.s32 %s88, 1
      %s90 = scalar_select %p87, %s88, %s89
      %p93 = pneg %p87
      %p94 = scmp.eq.s32.totalorder %s17, 1
      %p95 = por %p93, %p94
      %p96 = scmp.ne.s32.totalorder %s88, %s91
      %p97 = scmp.eq.s32.totalorder %s17, 0
      %p98 = por %p96, %p97
      %p99 = scmp.ne.s32.totalorder %s88, %s91
      %p100 = scmp.eq.s32.totalorder %s22, 1
      %p101 = por %p99, %p100
      %p102 = scmp.ne.s32.totalorder %s91, %s92
      %p103 = scmp.eq.s32.totalorder %s22, 0
      %p104 = por %p102, %p103
      %p105 = scmp.ne.s32.totalorder %s91, %s92
      %p106 = scmp.eq.s32.totalorder %s23, 1
      %p107 = por %p105, %p106
      %p109 = scmp.ne.s32.totalorder %s92, %s108
      %p110 = scmp.eq.s32.totalorder %s23, 0
      %p111 = por %p109, %p110
      %s112 = ssub.s32 %s24, %s36
      %s113 = ssub.s32 %s25, %s32
      %s114 = sor.u32 %s112, %s113
      %p115 = scmp.eq.s32.totalorder %s114, 0
      %s117 = sadd.s32 %s116, 1
      %s118 = scalar_select %p115, %s116, %s117
      %p121 = pneg %p115
      %p122 = scmp.eq.s32.totalorder %s17, 1
      %p123 = por %p121, %p122
      %p124 = scmp.ne.s32.totalorder %s116, %s119
      %p125 = scmp.eq.s32.totalorder %s17, 0
      %p126 = por %p124, %p125
      %p127 = scmp.ne.s32.totalorder %s116, %s119
      %p128 = scmp.eq.s32.totalorder %s22, 1
      %p129 = por %p127, %p128
      %p130 = scmp.ne.s32.totalorder %s119, %s120
      %p131 = scmp.eq.s32.totalorder %s22, 0
      %p132 = por %p130, %p131
      %p133 = scmp.ne.s32.totalorder %s119, %s120
      %p134 = scmp.eq.s32.totalorder %s23, 1
      %p135 = por %p133, %p134
      %p137 = scmp.ne.s32.totalorder %s120, %s136
      %p138 = scmp.eq.s32.totalorder %s23, 0
      %p139 = por %p137, %p138
      %s140 = ssub.s32 %s24, %s36
      %s141 = ssub.s32 %s25, %s32
      %s142 = sor.u32 %s140, %s141
      %p143 = scmp.eq.s32.totalorder %s142, 0
      %s145 = sadd.s32 %s144, 1
      %s146 = scalar_select %p143, %s144, %s145
      %p149 = pneg %p143
      %p150 = scmp.eq.s32.totalorder %s17, 1
      %p151 = por %p149, %p150
      %p152 = scmp.ne.s32.totalorder %s144, %s147
      %p153 = scmp.eq.s32.totalorder %s17, 0
      %p154 = por %p152, %p153
      %p155 = scmp.ne.s32.totalorder %s144, %s147
      %p156 = scmp.eq.s32.totalorder %s22, 1
      %p157 = por %p155, %p156
      %p158 = scmp.ne.s32.totalorder %s147, %s148
      %p159 = scmp.eq.s32.totalorder %s22, 0
      %p160 = por %p158, %p159
      %p161 = scmp.ne.s32.totalorder %s147, %s148
      %p162 = scmp.eq.s32.totalorder %s23, 1
      %p163 = por %p161, %p162
      %p165 = scmp.ne.s32.totalorder %s148, %s164
      %p166 = scmp.eq.s32.totalorder %s23, 0
      %p167 = por %p165, %p166
      %s168 = ssub.s32 %s24, %s36
      %s169 = ssub.s32 %s25, %s32
      %s170 = sor.u32 %s168, %s169
      %p171 = scmp.eq.s32.totalorder %s170, 0
      %s173 = sadd.s32 %s172, 1
      %s174 = scalar_select %p171, %s172, %s173
      %p177 = pneg %p171
      %p178 = scmp.eq.s32.totalorder %s17, 1
      %p179 = por %p177, %p178
      %p180 = scmp.ne.s32.totalorder %s172, %s175
      %p181 = scmp.eq.s32.totalorder %s17, 0
      %p182 = por %p180, %p181
      %p183 = scmp.ne.s32.totalorder %s172, %s175
      %p184 = scmp.eq.s32.totalorder %s22, 1
      %p185 = por %p183, %p184
      %p186 = scmp.ne.s32.totalorder %s175, %s176
      %p187 = scmp.eq.s32.totalorder %s22, 0
      %p188 = por %p186, %p187
      %p189 = scmp.ne.s32.totalorder %s175, %s176
      %p190 = scmp.eq.s32.totalorder %s23, 1
      %p191 = por %p189, %p190
      %p193 = scmp.ne.s32.totalorder %s176, %s192
      %p194 = scmp.eq.s32.totalorder %s23, 0
      %p195 = por %p193, %p194
      %s197 = sadd.s32 %s196, 1
      %p200 = scmp.eq.s32.totalorder %s17, 1
      %p201 = scmp.ne.s32.totalorder %s196, %s198
      %p202 = scmp.eq.s32.totalorder %s17, 0
      %p203 = por %p201, %p202
      %p204 = scmp.ne.s32.totalorder %s196, %s198
      %p205 = scmp.eq.s32.totalorder %s22, 1
      %p206 = por %p204, %p205
      %p207 = scmp.ne.s32.totalorder %s198, %s199
      %p208 = scmp.eq.s32.totalorder %s22, 0
      %p209 = por %p207, %p208
      %p210 = scmp.ne.s32.totalorder %s198, %s199
      %p211 = scmp.eq.s32.totalorder %s23, 1
      %p212 = por %p210, %p211
      %p214 = scmp.ne.s32.totalorder %s199, %s213
      %p215 = scmp.eq.s32.totalorder %s23, 0
      %p216 = por %p214, %p215
      %s217 = ssub.s32 %s24, %s36
      %s218 = ssub.s32 %s25, %s32
      %s219 = sor.u32 %s217, %s218
      %p220 = scmp.eq.s32.totalorder %s219, 0
      %s222 = sadd.s32 %s221, 1
      %s223 = scalar_select %p220, %s221, %s222
      %p226 = pneg %p220
      %p227 = scmp.eq.s32.totalorder %s17, 1
      %p228 = por %p226, %p227
      %p229 = scmp.ne.s32.totalorder %s221, %s224
      %p230 = scmp.eq.s32.totalorder %s17, 0
      %p231 = por %p229, %p230
      %p232 = scmp.ne.s32.totalorder %s221, %s224
      %p233 = scmp.eq.s32.totalorder %s22, 1
      %p234 = por %p232, %p233
      %p235 = scmp.ne.s32.totalorder %s224, %s225
      %p236 = scmp.eq.s32.totalorder %s22, 0
      %p237 = por %p235, %p236
      %p238 = scmp.ne.s32.totalorder %s224, %s225
      %p239 = scmp.eq.s32.totalorder %s23, 1
      %p240 = por %p238, %p239
      %p242 = scmp.ne.s32.totalorder %s225, %s241
      %p243 = scmp.eq.s32.totalorder %s23, 0
      %p244 = por %p242, %p243
      %p245 = scmp.le.s32.totalorder 1, %s17
      %p246 = scmp.lt.s32.totalorder %s17, 3
      %p247 = pnand %p245, %p246
      %p248 = pneg %p247
      // Predicated region
      $region9: #{tpu_custom_call.1} parent=5 // pred_check
        _
      $region10: #{tpu_custom_call.1} parent=5 // pred_check_branch
        %250 = sbr.rel (%p247) target = $region12
      $region11: #{tpu_custom_call.1} parent=5 // pred_region
        %s251 = ssub.s32 %s17, 1
        // Predicated region
        $region13: #{tpu_custom_call.1} parent=11 // pred_check
          %p252 = pneg %p76
        $region14: #{tpu_custom_call.1} parent=11 // pred_check_branch
          %254 = sbr.rel (%p252) target = $region16
        $region15: #{tpu_custom_call.1} parent=11 // pred_region
          _
        $region16: #{tpu_custom_call.1} parent=11 // pred_fallthru
          _
        // Predicated region
        $region17: #{tpu_custom_call.1} parent=11 // pred_check
          %p255 = pneg %p209
        $region18: #{tpu_custom_call.1} parent=11 // pred_check_branch
          %257 = sbr.rel (%p255) target = $region20
        $region19: #{tpu_custom_call.1} parent=11 // pred_region
          _
        $region20: #{tpu_custom_call.1} parent=11 // pred_fallthru
          _
      $region12: #{tpu_custom_call.1} parent=5 // pred_fallthru
        _
      %p258 = scmp.lt.s32.totalorder %s17, 2
      // Predicated region
      $region21: #{tpu_custom_call.1} parent=5 // pred_check
        %p259 = pneg %p258
      $region22: #{tpu_custom_call.1} parent=5 // pred_check_branch
        %261 = sbr.rel (%p259) target = $region24
      $region23: #{tpu_custom_call.1} parent=5 // pred_region
        // Predicated region
        $region25: #{tpu_custom_call.1} parent=23 // pred_check
          %p262 = pneg %p49
        $region26: #{tpu_custom_call.1} parent=23 // pred_check_branch
          %264 = sbr.rel (%p262) target = $region28
        $region27: #{tpu_custom_call.1} parent=23 // pred_region
          %p265 = scmp.lt.s32.totalorder %s24, 1
          %s266 = scalar_select %p265, %s24, 1
          %s267 = smul.addr %s266, 4
          %s268 = smul.addr %s267, 8
          %s269 = scalar_lea.vmem %s0, %s268
        $region28: #{tpu_custom_call.1} parent=23 // pred_fallthru
          _
        // Predicated region
        $region29: #{tpu_custom_call.1} parent=23 // pred_check
          %p270 = pneg %p98
        $region30: #{tpu_custom_call.1} parent=23 // pred_check_branch
          %272 = sbr.rel (%p270) target = $region32
        $region31: #{tpu_custom_call.1} parent=23 // pred_region
          %p273 = scmp.lt.s32.totalorder %s24, 1
          %s274 = scalar_select %p273, %s24, 1
          %p275 = scmp.lt.s32.totalorder %s25, 0
          %s276 = scalar_select %p275, %s25, 0
          %s277 = sadd.s32 %s276, %s274
          %s278 = smul.addr %s277, 8
          %s279 = scalar_lea.vmem %s2, %s278
        $region32: #{tpu_custom_call.1} parent=23 // pred_fallthru
          _
        // Predicated region
        $region33: #{tpu_custom_call.1} parent=23 // pred_check
          %p280 = pneg %p126
        $region34: #{tpu_custom_call.1} parent=23 // pred_check_branch
          %282 = sbr.rel (%p280) target = $region36
        $region35: #{tpu_custom_call.1} parent=23 // pred_region
          %p283 = scmp.lt.s32.totalorder %s24, 1
          %s284 = scalar_select %p283, %s24, 1
          %p285 = scmp.lt.s32.totalorder %s25, 0
          %s286 = scalar_select %p285, %s25, 0
          %s287 = sadd.s32 %s286, %s284
          %s288 = smul.addr %s287, 8
          %s289 = scalar_lea.vmem %s3, %s288
        $region36: #{tpu_custom_call.1} parent=23 // pred_fallthru
          _
        // Predicated region
        $region37: #{tpu_custom_call.1} parent=23 // pred_check
          %p290 = pneg %p154
        $region38: #{tpu_custom_call.1} parent=23 // pred_check_branch
          %292 = sbr.rel (%p290) target = $region40
        $region39: #{tpu_custom_call.1} parent=23 // pred_region
          %p293 = scmp.lt.s32.totalorder %s24, 1
          %s294 = scalar_select %p293, %s24, 1
          %p295 = scmp.lt.s32.totalorder %s25, 0
          %s296 = scalar_select %p295, %s25, 0
          %s297 = sadd.s32 %s296, %s294
          %s298 = smul.addr %s297, 8
          %s299 = scalar_lea.vmem %s4, %s298
        $region40: #{tpu_custom_call.1} parent=23 // pred_fallthru
          _
        // Predicated region
        $region41: #{tpu_custom_call.1} parent=23 // pred_check
          %p300 = pneg %p182
        $region42: #{tpu_custom_call.1} parent=23 // pred_check_branch
          %302 = sbr.rel (%p300) target = $region44
        $region43: #{tpu_custom_call.1} parent=23 // pred_region
          %s303 = sand.u32 %s172, 1
          %s304 = scalar_lea.sflag [#allocation4], %s303
          %s305 = sand.u32 %s172, 1
          %s306 = smul.addr %s305, 8
          %s307 = scalar_lea.vmem [#allocation3], %s306
          %s309 = ssub.s32 128, 128
          %310 = vsyncadd %s304, %s309
          %s311 = sadd.s32 %s25, %s24
          %s312 = smul.addr %s311, 128
          %s313 = scalar_lea.hbm %s5, %s312
          %s315 = sshll.u32 %s307, 4
          %s316 = int_to_ptr.vmem [resolvable:$true] %s315
          %318 = dma.hbm_to_vmem [thread:$0]  %s313, 128, %s316, %s304
        $region44: #{tpu_custom_call.1} parent=23 // pred_fallthru
          _
      $region24: #{tpu_custom_call.1} parent=5 // pred_fallthru
        _
      %p319 = scmp.le.s32.totalorder 1, %s17
      %p320 = scmp.lt.s32.totalorder %s17, 3
      %p321 = pnand %p319, %p320
      %p322 = pneg %p321
      // Predicated region
      $region45: #{tpu_custom_call.1} parent=5 // pred_check
        _
      $region46: #{tpu_custom_call.1} parent=5 // pred_check_branch
        %324 = sbr.rel (%p321) target = $region48
      $region47: #{tpu_custom_call.1} parent=5 // pred_region
        %s325 = ssub.s32 %s17, 1
        %s326 = sand.u32 %s175, 1
        %s327 = scalar_lea.sflag [#allocation4], %s326
        %s328 = sand.u32 %s175, 1
        %s329 = smul.addr %s328, 8
        %s330 = scalar_lea.vmem [#allocation3], %s329
        // Predicated region
        $region49: #{tpu_custom_call.1} parent=47 // pred_check
          %p331 = pneg %p188
        $region50: #{tpu_custom_call.1} parent=47 // pred_check_branch
          %333 = sbr.rel (%p331) target = $region52
        $region51: #{tpu_custom_call.1} parent=47 // pred_region
          %334 = dma.done %s327, 128
        $region52: #{tpu_custom_call.1} parent=47 // pred_fallthru
          _
        %p335 = scmp.lt.s32.totalorder %s26, 1
        %s336 = scalar_select %p335, %s26, 1
        %s337 = smul.addr %s336, 4
        %s338 = smul.addr %s337, 8
        %s339 = scalar_lea.vmem %s0, %s338
        %p340 = pneg %p55
        %p341 = pneg %p52
        %p342 = pneg %p76
        %p343 = pneg %p73
        %p344 = scmp.lt.s32.totalorder %s26, 1
        %s345 = scalar_select %p344, %s26, 1
        %p346 = scmp.lt.s32.totalorder %s27, 0
        %s347 = scalar_select %p346, %s27, 0
        %s348 = sadd.s32 %s347, %s345
        %s349 = smul.addr %s348, 8
        %s350 = scalar_lea.vmem %s2, %s349
        %p351 = pneg %p104
        %p352 = pneg %p101
        %p353 = scmp.lt.s32.totalorder %s26, 1
        %s354 = scalar_select %p353, %s26, 1
        %p355 = scmp.lt.s32.totalorder %s27, 0
        %s356 = scalar_select %p355, %s27, 0
        %s357 = sadd.s32 %s356, %s354
        %s358 = smul.addr %s357, 8
        %s359 = scalar_lea.vmem %s3, %s358
        %p360 = pneg %p132
        %p361 = pneg %p129
        %p362 = scmp.lt.s32.totalorder %s26, 1
        %s363 = scalar_select %p362, %s26, 1
        %p364 = scmp.lt.s32.totalorder %s27, 0
        %s365 = scalar_select %p364, %s27, 0
        %s366 = sadd.s32 %s365, %s363
        %s367 = smul.addr %s366, 8
        %s368 = scalar_lea.vmem %s4, %s367
        %p369 = pneg %p160
        %p370 = pneg %p157
        %s371 = sand.u32 %s175, 1
        %s372 = scalar_lea.sflag [#allocation4], %s371
        %s373 = sand.u32 %s175, 1
        %s374 = smul.addr %s373, 8
        %s375 = scalar_lea.vmem [#allocation3], %s374
        %p376 = pneg %p188
        %p377 = pneg %p185
        %p378 = pneg %p209
        %p379 = pneg %p206
        %p380 = pneg %p237
        %p381 = pneg %p234
        %p382 = scmp.lt.s32.totalorder %s26, 1
        %s383 = scalar_select %p382, %s26, 1
        %p384 = scmp.lt.s32.totalorder %s27, 0
        %s385 = scalar_select %p384, %s27, 0
        %s386 = smul.addr %s383, 4
        %s387 = sadd.s32 %s385, %s386
        %s388 = smul.addr %s387, 8
        %s389 = scalar_lea.vmem %s7, %s388
        %p390 = scmp.lt.s32.totalorder %s26, 1
        %s391 = scalar_select %p390, %s26, 1
        %s392 = smul.addr %s391, 4
        %s393 = smul.addr %s392, 8
        %s394 = scalar_lea.vmem %s0, %s393
        %p395 = scmp.lt.s32.totalorder %s26, 1
        %s396 = scalar_select %p395, %s26, 1
        %p397 = scmp.lt.s32.totalorder %s27, 0
        %s398 = scalar_select %p397, %s27, 0
        %s399 = sadd.s32 %s398, %s396
        %s400 = smul.addr %s399, 8
        %s401 = scalar_lea.vmem %s2, %s400
        %p402 = scmp.lt.s32.totalorder %s26, 1
        %s403 = scalar_select %p402, %s26, 1
        %p404 = scmp.lt.s32.totalorder %s27, 0
        %s405 = scalar_select %p404, %s27, 0
        %s406 = sadd.s32 %s405, %s403
        %s407 = smul.addr %s406, 8
        %s408 = scalar_lea.vmem %s3, %s407
        %p409 = scmp.lt.s32.totalorder %s26, 1
        %s410 = scalar_select %p409, %s26, 1
        %p411 = scmp.lt.s32.totalorder %s27, 0
        %s412 = scalar_select %p411, %s27, 0
        %s413 = sadd.s32 %s412, %s410
        %s414 = smul.addr %s413, 8
        %s415 = scalar_lea.vmem %s4, %s414
        %p416 = scmp.lt.s32.totalorder %s26, 1
        %s417 = scalar_select %p416, %s26, 1
        %p418 = scmp.lt.s32.totalorder %s27, 0
        %s419 = scalar_select %p418, %s27, 0
        %s420 = smul.addr %s417, 4
        %s421 = sadd.s32 %s419, %s420
        %s422 = smul.addr %s421, 8
        %s423 = scalar_lea.vmem %s7, %s422
        %v424 = vld [vmem:[%s1] sm:$0xff]
        %v425 = vld [vmem:[%s1 + $0x8] sm:$0xff]
        %v426 = vld [vmem:[%s1 + $0x10] sm:$0xff]
        %v427 = vld [vmem:[%s1 + $0x18] sm:$0xff]
        %v428 = vld [vmem:[%s394] sm:$0xff]
        %v429 = vld [vmem:[%s394 + $0x8] sm:$0xff]
        %v430 = vld [vmem:[%s394 + $0x10] sm:$0xff]
        %v431 = vld [vmem:[%s394 + $0x18] sm:$0xff]
        %vm432 = vcmask 261120
        %v434 = vsel %vm432, %v424, 0
        %v437 = vsel %vm432, %v425, 0
        %v440 = vsel %vm432, %v426, 0
        %v443 = vsel %vm432, %v427, 0
        %445 = vmatprep.subr.mxu0 0.0
        %446 = vmatpush1.msra.mxu0 %v428
        %447 = vmatprep.subr.mxu0 0.0
        %448 = vmatpush1.msra.mxu0 %v429
        %449 = vmatprep.subr.mxu0 0.0
        %450 = vmatpush1.msra.mxu0 %v430
        %451 = vmatprep.subr.mxu0 0.0
        %452 = vmatpush1.msra.mxu0 %v431
        %453 = vmatprep.subr.mxu0 0.0
        %454 = vmatpush1.msra.mxu0 0.0
        %455 = vmatprep.subr.mxu0 0.0
        %456 = vmatpush1.msra.mxu0 0.0
        %457 = vmatprep.subr.mxu0 0.0
        %458 = vmatpush1.msra.mxu0 0.0
        %459 = vmatprep.subr.mxu0 0.0
        %460 = vmatpush1.msra.mxu0 0.0
        %461 = vmatprep.subr.mxu0 0.0
        %462 = vmatpush1.msra.mxu0 0.0
        %463 = vmatprep.subr.mxu0 0.0
        %464 = vmatpush1.msra.mxu0 0.0
        %465 = vmatprep.subr.mxu0 0.0
        %466 = vmatpush1.msra.mxu0 0.0
        %467 = vmatprep.subr.mxu0 0.0
        %468 = vmatpush1.msra.mxu0 0.0
        %469 = vmatprep.subr.mxu0 0.0
        %470 = vmatpush1.msra.mxu0 0.0
        %471 = vmatprep.subr.mxu0 0.0
        %472 = vmatpush1.msra.mxu0 0.0
        %473 = vmatprep.subr.mxu0 0.0
        %474 = vmatpush1.msra.mxu0 0.0
        %475 = vmatprep.subr.mxu0 0.0
        %476 = vmatpush1.msra.mxu0 0.0
        %477 = vmatprep.subr.mxu0 0.0
        %478 = vmatpush1.msra.mxu0 0.0
        %479 = vmatprep.subr.mxu0 0.0
        %480 = vmatpush1.msra.mxu0 0.0
        %481 = vmatprep.subr.mxu0 0.0
        %482 = vmatpush1.msra.mxu0 0.0
        %483 = vmatprep.subr.mxu0 0.0
        %484 = vmatpush1.msra.mxu0 0.0
        %485 = vmatprep.subr.mxu0 0.0
        %486 = vmatpush1.msra.mxu0 0.0
        %487 = vmatprep.subr.mxu0 0.0
        %488 = vmatpush1.msra.mxu0 0.0
        %489 = vmatprep.subr.mxu0 0.0
        %490 = vmatpush1.msra.mxu0 0.0
        %491 = vmatprep.subr.mxu0 0.0
        %492 = vmatpush1.msra.mxu0 0.0
        %493 = vmatprep.subr.mxu0 0.0
        %494 = vmatpush1.msra.mxu0 0.0
        %495 = vmatprep.subr.mxu0 0.0
        %496 = vmatpush1.msra.mxu0 0.0
        %497 = vmatprep.subr.mxu0 0.0
        %498 = vmatpush1.msra.mxu0 0.0
        %499 = vmatprep.subr.mxu0 0.0
        %500 = vmatpush1.msra.mxu0 0.0
        %501 = vmatprep.subr.mxu0 0.0
        %502 = vmatpush1.msra.mxu0 0.0
        %503 = vmatprep.subr.mxu0 0.0
        %504 = vmatpush1.msra.mxu0 0.0
        %505 = vmatprep.subr.mxu0 0.0
        %506 = vmatpush1.msra.mxu0 0.0
        %507 = vmatprep.subr.mxu0 0.0
        %508 = vmatpush1.msra.mxu0 0.0
        %509 = vmatprep.mubr.f32.mxu0 0.0
        %510 = vmatmul.mubr.f32.gmra.mrb[0].mxu0 %v434
        %v511 = vpop.f32.mrb[0].mxu0
        %v512 = vadd.f32 0.0, %v511
        %v513 = vpop.f32.mrb[0].mxu0
        %514 = vmatprep.mubr.f32.mxu0 0.0
        %515 = vmatmul.mubr.f32.gmra.mrb[0].mxu0 %v437
        %v516 = vpop.f32.mrb[0].mxu0
        %v517 = vadd.f32 0.0, %v516
        %v518 = vpop.f32.mrb[0].mxu0
        %519 = vmatprep.mubr.f32.mxu0 0.0
        %520 = vmatmul.mubr.f32.gmra.mrb[0].mxu0 %v440
        %v521 = vpop.f32.mrb[0].mxu0
        %v522 = vadd.f32 0.0, %v521
        %v523 = vpop.f32.mrb[0].mxu0
        %524 = vmatprep.mubr.f32.mxu0 0.0
        %525 = vmatmul.mubr.f32.gmra.mrb[0].mxu0 %v443
        %v526 = vpop.f32.mrb[0].mxu0
        %v527 = vadd.f32 0.0, %v526
        %v528 = vpop.f32.mrb[0].mxu0
        %529 = vdwg.mxu0
        %s530 = sld [smem:[#allocation2]]
        %v531 = vld [vmem:[%s408] sm:$0xff]
        %v533 = vsel %vm432, %v531, 0
        %535 = vmatprep.subr.mxu0 0.0
        %536 = vmatpush1.msra.mxu0 %v512
        %537 = vmatprep.subr.mxu0 0.0
        %538 = vmatpush1.msra.mxu0 %v517
        %539 = vmatprep.subr.mxu0 0.0
        %540 = vmatpush1.msra.mxu0 %v522
        %541 = vmatprep.subr.mxu0 0.0
        %542 = vmatpush1.msra.mxu0 %v527
        %543 = vmatprep.subr.mxu0 0.0
        %544 = vmatpush1.msra.mxu0 0.0
        %545 = vmatprep.subr.mxu0 0.0
        %546 = vmatpush1.msra.mxu0 0.0
        %547 = vmatprep.subr.mxu0 0.0
        %548 = vmatpush1.msra.mxu0 0.0
        %549 = vmatprep.subr.mxu0 0.0
        %550 = vmatpush1.msra.mxu0 0.0
        %551 = vmatprep.subr.mxu0 0.0
        %552 = vmatpush1.msra.mxu0 0.0
        %553 = vmatprep.subr.mxu0 0.0
        %554 = vmatpush1.msra.mxu0 0.0
        %555 = vmatprep.subr.mxu0 0.0
        %556 = vmatpush1.msra.mxu0 0.0
        %557 = vmatprep.subr.mxu0 0.0
        %558 = vmatpush1.msra.mxu0 0.0
        %559 = vmatprep.subr.mxu0 0.0
        %560 = vmatpush1.msra.mxu0 0.0
        %561 = vmatprep.subr.mxu0 0.0
        %562 = vmatpush1.msra.mxu0 0.0
        %563 = vmatprep.subr.mxu0 0.0
        %564 = vmatpush1.msra.mxu0 0.0
        %565 = vmatprep.subr.mxu0 0.0
        %566 = vmatpush1.msra.mxu0 0.0
        %567 = vmatprep.subr.mxu0 0.0
        %568 = vmatpush1.msra.mxu0 0.0
        %569 = vmatprep.subr.mxu0 0.0
        %570 = vmatpush1.msra.mxu0 0.0
        %571 = vmatprep.subr.mxu0 0.0
        %572 = vmatpush1.msra.mxu0 0.0
        %573 = vmatprep.subr.mxu0 0.0
        %574 = vmatpush1.msra.mxu0 0.0
        %575 = vmatprep.subr.mxu0 0.0
        %576 = vmatpush1.msra.mxu0 0.0
        %577 = vmatprep.subr.mxu0 0.0
        %578 = vmatpush1.msra.mxu0 0.0
        %579 = vmatprep.subr.mxu0 0.0
        %580 = vmatpush1.msra.mxu0 0.0
        %581 = vmatprep.subr.mxu0 0.0
        %582 = vmatpush1.msra.mxu0 0.0
        %583 = vmatprep.subr.mxu0 0.0
        %584 = vmatpush1.msra.mxu0 0.0
        %585 = vmatprep.subr.mxu0 0.0
        %586 = vmatpush1.msra.mxu0 0.0
        %587 = vmatprep.subr.mxu0 0.0
        %588 = vmatpush1.msra.mxu0 0.0
        %589 = vmatprep.subr.mxu0 0.0
        %590 = vmatpush1.msra.mxu0 0.0
        %591 = vmatprep.subr.mxu0 0.0
        %592 = vmatpush1.msra.mxu0 0.0
        %593 = vmatprep.subr.mxu0 0.0
        %594 = vmatpush1.msra.mxu0 0.0
        %595 = vmatprep.subr.mxu0 0.0
        %596 = vmatpush1.msra.mxu0 0.0
        %597 = vmatprep.subr.mxu0 0.0
        %598 = vmatpush1.msra.mxu0 0.0
        %599 = vmatprep.mubr.f32.mxu0 0.0
        %600 = vmatmul.mubr.f32.gmra.mrb[0].mxu0 %v533
        %v601 = vpop.f32.mrb[0].mxu0
        %v602 = vadd.f32 0.0, %v601
        %v603 = vpop.f32.mrb[0].mxu0
        %604 = vdwg.mxu0
        %v605 = vstv %s530
        %v606 = vadd.f32 %v602, %v605
        %vm607 = vcmask 7168
        %608 = vst.msk [vmem:[%s423] sm:$0xff] %vm607, %v606
        %v609 = vld [vmem:[%s401] sm:$0xff]
        %v611 = vsel %vm432, %v609, 0
        %613 = vmatprep.subr.mxu0 0.0
        %614 = vmatpush1.msra.mxu0 %v512
        %615 = vmatprep.subr.mxu0 0.0
        %616 = vmatpush1.msra.mxu0 %v517
        %617 = vmatprep.subr.mxu0 0.0
        %618 = vmatpush1.msra.mxu0 %v522
        %619 = vmatprep.subr.mxu0 0.0
        %620 = vmatpush1.msra.mxu0 %v527
        %621 = vmatprep.subr.mxu0 0.0
        %622 = vmatpush1.msra.mxu0 0.0
        %623 = vmatprep.subr.mxu0 0.0
        %624 = vmatpush1.msra.mxu0 0.0
        %625 = vmatprep.subr.mxu0 0.0
        %626 = vmatpush1.msra.mxu0 0.0
        %627 = vmatprep.subr.mxu0 0.0
        %628 = vmatpush1.msra.mxu0 0.0
        %629 = vmatprep.subr.mxu0 0.0
        %630 = vmatpush1.msra.mxu0 0.0
        %631 = vmatprep.subr.mxu0 0.0
        %632 = vmatpush1.msra.mxu0 0.0
        %633 = vmatprep.subr.mxu0 0.0
        %634 = vmatpush1.msra.mxu0 0.0
        %635 = vmatprep.subr.mxu0 0.0
        %636 = vmatpush1.msra.mxu0 0.0
        %637 = vmatprep.subr.mxu0 0.0
        %638 = vmatpush1.msra.mxu0 0.0
        %639 = vmatprep.subr.mxu0 0.0
        %640 = vmatpush1.msra.mxu0 0.0
        %641 = vmatprep.subr.mxu0 0.0
        %642 = vmatpush1.msra.mxu0 0.0
        %643 = vmatprep.subr.mxu0 0.0
        %644 = vmatpush1.msra.mxu0 0.0
        %645 = vmatprep.subr.mxu0 0.0
        %646 = vmatpush1.msra.mxu0 0.0
        %647 = vmatprep.subr.mxu0 0.0
        %648 = vmatpush1.msra.mxu0 0.0
        %649 = vmatprep.subr.mxu0 0.0
        %650 = vmatpush1.msra.mxu0 0.0
        %651 = vmatprep.subr.mxu0 0.0
        %652 = vmatpush1.msra.mxu0 0.0
        %653 = vmatprep.subr.mxu0 0.0
        %654 = vmatpush1.msra.mxu0 0.0
        %655 = vmatprep.subr.mxu0 0.0
        %656 = vmatpush1.msra.mxu0 0.0
        %657 = vmatprep.subr.mxu0 0.0
        %658 = vmatpush1.msra.mxu0 0.0
        %659 = vmatprep.subr.mxu0 0.0
        %660 = vmatpush1.msra.mxu0 0.0
        %661 = vmatprep.subr.mxu0 0.0
        %662 = vmatpush1.msra.mxu0 0.0
        %663 = vmatprep.subr.mxu0 0.0
        %664 = vmatpush1.msra.mxu0 0.0
        %665 = vmatprep.subr.mxu0 0.0
        %666 = vmatpush1.msra.mxu0 0.0
        %667 = vmatprep.subr.mxu0 0.0
        %668 = vmatpush1.msra.mxu0 0.0
        %669 = vmatprep.subr.mxu0 0.0
        %670 = vmatpush1.msra.mxu0 0.0
        %671 = vmatprep.subr.mxu0 0.0
        %672 = vmatpush1.msra.mxu0 0.0
        %673 = vmatprep.subr.mxu0 0.0
        %674 = vmatpush1.msra.mxu0 0.0
        %675 = vmatprep.subr.mxu0 0.0
        %676 = vmatpush1.msra.mxu0 0.0
        %677 = vmatprep.mubr.f32.mxu0 0.0
        %678 = vmatmul.mubr.f32.gmra.mrb[0].mxu0 %v611
        %v679 = vpop.f32.mrb[0].mxu0
        %v680 = vadd.f32 0.0, %v679
        %v681 = vpop.f32.mrb[0].mxu0
        %682 = vdwg.mxu0
        %v683 = vadd.f32 %v680, %v605
        %685 = vrot.lane.b32.xlu0 %v683, 127
        %v686 = vpop.permute.xlu0 %685
        %s688 = scalar_lea.vmem %s423, 8
        %689 = vst.msk [vmem:[%s688] sm:$0xff] %vm607, %v686
        %v690 = vld [vmem:[%s330] sm:$0xff]
        %v692 = vsel %vm432, %v690, 0
        %694 = vmatprep.subr.mxu0 0.0
        %695 = vmatpush1.msra.mxu0 %v512
        %696 = vmatprep.subr.mxu0 0.0
        %697 = vmatpush1.msra.mxu0 %v517
        %698 = vmatprep.subr.mxu0 0.0
        %699 = vmatpush1.msra.mxu0 %v522
        %700 = vmatprep.subr.mxu0 0.0
        %701 = vmatpush1.msra.mxu0 %v527
        %702 = vmatprep.subr.mxu0 0.0
        %703 = vmatpush1.msra.mxu0 0.0
        %704 = vmatprep.subr.mxu0 0.0
        %705 = vmatpush1.msra.mxu0 0.0
        %706 = vmatprep.subr.mxu0 0.0
        %707 = vmatpush1.msra.mxu0 0.0
        %708 = vmatprep.subr.mxu0 0.0
        %709 = vmatpush1.msra.mxu0 0.0
        %710 = vmatprep.subr.mxu0 0.0
        %711 = vmatpush1.msra.mxu0 0.0
        %712 = vmatprep.subr.mxu0 0.0
        %713 = vmatpush1.msra.mxu0 0.0
        %714 = vmatprep.subr.mxu0 0.0
        %715 = vmatpush1.msra.mxu0 0.0
        %716 = vmatprep.subr.mxu0 0.0
        %717 = vmatpush1.msra.mxu0 0.0
        %718 = vmatprep.subr.mxu0 0.0
        %719 = vmatpush1.msra.mxu0 0.0
        %720 = vmatprep.subr.mxu0 0.0
        %721 = vmatpush1.msra.mxu0 0.0
        %722 = vmatprep.subr.mxu0 0.0
        %723 = vmatpush1.msra.mxu0 0.0
        %724 = vmatprep.subr.mxu0 0.0
        %725 = vmatpush1.msra.mxu0 0.0
        %726 = vmatprep.subr.mxu0 0.0
        %727 = vmatpush1.msra.mxu0 0.0
        %728 = vmatprep.subr.mxu0 0.0
        %729 = vmatpush1.msra.mxu0 0.0
        %730 = vmatprep.subr.mxu0 0.0
        %731 = vmatpush1.msra.mxu0 0.0
        %732 = vmatprep.subr.mxu0 0.0
        %733 = vmatpush1.msra.mxu0 0.0
        %734 = vmatprep.subr.mxu0 0.0
        %735 = vmatpush1.msra.mxu0 0.0
        %736 = vmatprep.subr.mxu0 0.0
        %737 = vmatpush1.msra.mxu0 0.0
        %738 = vmatprep.subr.mxu0 0.0
        %739 = vmatpush1.msra.mxu0 0.0
        %740 = vmatprep.subr.mxu0 0.0
        %741 = vmatpush1.msra.mxu0 0.0
        %742 = vmatprep.subr.mxu0 0.0
        %743 = vmatpush1.msra.mxu0 0.0
        %744 = vmatprep.subr.mxu0 0.0
        %745 = vmatpush1.msra.mxu0 0.0
        %746 = vmatprep.subr.mxu0 0.0
        %747 = vmatpush1.msra.mxu0 0.0
        %748 = vmatprep.subr.mxu0 0.0
        %749 = vmatpush1.msra.mxu0 0.0
        %750 = vmatprep.subr.mxu0 0.0
        %751 = vmatpush1.msra.mxu0 0.0
        %752 = vmatprep.subr.mxu0 0.0
        %753 = vmatpush1.msra.mxu0 0.0
        %754 = vmatprep.subr.mxu0 0.0
        %755 = vmatpush1.msra.mxu0 0.0
        %756 = vmatprep.subr.mxu0 0.0
        %757 = vmatpush1.msra.mxu0 0.0
        %758 = vmatprep.mubr.f32.mxu0 0.0
        %759 = vmatmul.mubr.f32.gmra.mrb[0].mxu0 %v692
        %v760 = vpop.f32.mrb[0].mxu0
        %v761 = vadd.f32 0.0, %v760
        %v762 = vpop.f32.mrb[0].mxu0
        %763 = vdwg.mxu0
        %v764 = vadd.f32 %v761, %v605
        %s765 = scalar_lea.vmem %s423, 16
        %766 = vst.msk [vmem:[%s765] sm:$0xff] %vm607, %v764
        %v767 = vld [vmem:[%s415] sm:$0xff]
        %v769 = vsel %vm432, %v767, 0
        %771 = vmatprep.subr.mxu0 0.0
        %772 = vmatpush1.msra.mxu0 %v512
        %773 = vmatprep.subr.mxu0 0.0
        %774 = vmatpush1.msra.mxu0 %v517
        %775 = vmatprep.subr.mxu0 0.0
        %776 = vmatpush1.msra.mxu0 %v522
        %777 = vmatprep.subr.mxu0 0.0
        %778 = vmatpush1.msra.mxu0 %v527
        %779 = vmatprep.subr.mxu0 0.0
        %780 = vmatpush1.msra.mxu0 0.0
        %781 = vmatprep.subr.mxu0 0.0
        %782 = vmatpush1.msra.mxu0 0.0
        %783 = vmatprep.subr.mxu0 0.0
        %784 = vmatpush1.msra.mxu0 0.0
        %785 = vmatprep.subr.mxu0 0.0
        %786 = vmatpush1.msra.mxu0 0.0
        %787 = vmatprep.subr.mxu0 0.0
        %788 = vmatpush1.msra.mxu0 0.0
        %789 = vmatprep.subr.mxu0 0.0
        %790 = vmatpush1.msra.mxu0 0.0
        %791 = vmatprep.subr.mxu0 0.0
        %792 = vmatpush1.msra.mxu0 0.0
        %793 = vmatprep.subr.mxu0 0.0
        %794 = vmatpush1.msra.mxu0 0.0
        %795 = vmatprep.subr.mxu0 0.0
        %796 = vmatpush1.msra.mxu0 0.0
        %797 = vmatprep.subr.mxu0 0.0
        %798 = vmatpush1.msra.mxu0 0.0
        %799 = vmatprep.subr.mxu0 0.0
        %800 = vmatpush1.msra.mxu0 0.0
        %801 = vmatprep.subr.mxu0 0.0
        %802 = vmatpush1.msra.mxu0 0.0
        %803 = vmatprep.subr.mxu0 0.0
        %804 = vmatpush1.msra.mxu0 0.0
        %805 = vmatprep.subr.mxu0 0.0
        %806 = vmatpush1.msra.mxu0 0.0
        %807 = vmatprep.subr.mxu0 0.0
        %808 = vmatpush1.msra.mxu0 0.0
        %809 = vmatprep.subr.mxu0 0.0
        %810 = vmatpush1.msra.mxu0 0.0
        %811 = vmatprep.subr.mxu0 0.0
        %812 = vmatpush1.msra.mxu0 0.0
        %813 = vmatprep.subr.mxu0 0.0
        %814 = vmatpush1.msra.mxu0 0.0
        %815 = vmatprep.subr.mxu0 0.0
        %816 = vmatpush1.msra.mxu0 0.0
        %817 = vmatprep.subr.mxu0 0.0
        %818 = vmatpush1.msra.mxu0 0.0
        %819 = vmatprep.subr.mxu0 0.0
        %820 = vmatpush1.msra.mxu0 0.0
        %821 = vmatprep.subr.mxu0 0.0
        %822 = vmatpush1.msra.mxu0 0.0
        %823 = vmatprep.subr.mxu0 0.0
        %824 = vmatpush1.msra.mxu0 0.0
        %825 = vmatprep.subr.mxu0 0.0
        %826 = vmatpush1.msra.mxu0 0.0
        %827 = vmatprep.subr.mxu0 0.0
        %828 = vmatpush1.msra.mxu0 0.0
        %829 = vmatprep.subr.mxu0 0.0
        %830 = vmatpush1.msra.mxu0 0.0
        %831 = vmatprep.subr.mxu0 0.0
        %832 = vmatpush1.msra.mxu0 0.0
        %833 = vmatprep.subr.mxu0 0.0
        %834 = vmatpush1.msra.mxu0 0.0
        %835 = vmatprep.mubr.f32.mxu0 0.0
        %836 = vmatmul.mubr.f32.gmra.mrb[0].mxu0 %v769
        %v837 = vpop.f32.mrb[0].mxu0
        %v838 = vadd.f32 0.0, %v837
        %v839 = vpop.f32.mrb[0].mxu0
        %840 = vdwg.mxu0
        %v841 = vadd.f32 %v838, %v605
        %843 = vrot.lane.b32.xlu0 %v841, 127
        %v844 = vpop.permute.xlu0 %843
        %s846 = scalar_lea.vmem %s423, 24
        %847 = vst.msk [vmem:[%s846] sm:$0xff] %vm607, %v844
        %p848 = scmp.lt.s32.totalorder %s26, 1
        %s849 = scalar_select %p848, %s26, 1
        %p850 = scmp.lt.s32.totalorder %s27, 0
        %s851 = scalar_select %p850, %s27, 0
        %s852 = smul.addr %s849, 4
        %s853 = sadd.s32 %s851, %s852
        %s854 = smul.addr %s853, 8
        %s855 = scalar_lea.vmem %s7, %s854
        // Predicated region
        $region53: #{tpu_custom_call.1} parent=47 // pred_check
          %p856 = pneg %p234
        $region54: #{tpu_custom_call.1} parent=47 // pred_check_branch
          %858 = sbr.rel (%p856) target = $region56
        $region55: #{tpu_custom_call.1} parent=47 // pred_region
          _
        $region56: #{tpu_custom_call.1} parent=47 // pred_fallthru
          _
      $region48: #{tpu_custom_call.1} parent=5 // pred_fallthru
        _
      %p859 = scmp.le.s32.totalorder 2, %s17
      // Predicated region
      $region57: #{tpu_custom_call.1} parent=5 // pred_check
        %p860 = pneg %p859
      $region58: #{tpu_custom_call.1} parent=5 // pred_check_branch
        %862 = sbr.rel (%p860) target = $region60
      $region59: #{tpu_custom_call.1} parent=5 // pred_region
        %s863 = ssub.s32 %s17, 2
        // Predicated region
        $region61: #{tpu_custom_call.1} parent=59 // pred_check
          %p864 = pneg %p240
        $region62: #{tpu_custom_call.1} parent=59 // pred_check_branch
          %866 = sbr.rel (%p864) target = $region64
        $region63: #{tpu_custom_call.1} parent=59 // pred_region
          %p867 = scmp.lt.s32.totalorder %s28, 1
          %s868 = scalar_select %p867, %s28, 1
          %p869 = scmp.lt.s32.totalorder %s29, 0
          %s870 = scalar_select %p869, %s29, 0
          %s871 = smul.addr %s868, 4
          %s872 = sadd.s32 %s870, %s871
          %s873 = smul.addr %s872, 8
          %s874 = scalar_lea.vmem %s7, %s873
        $region64: #{tpu_custom_call.1} parent=59 // pred_fallthru
          _
      $region60: #{tpu_custom_call.1} parent=5 // pred_fallthru
        _
    $region6: #{tpu_custom_call.1} parent=1 // loop_footer
      %s21 = sadd.s32 1, %s17
    $region7: #{tpu_custom_call.1} parent=1 // loop_footer_branch
      %16 = sbr.rel target = $region3
    $region8: #{tpu_custom_call.1} parent=1 // loop_exit
      _
    %875 = vsyncpa [#allocation4], 1
    %s876 = scalar_lea.sflag [#allocation4], 1
    %877 = vsyncpa %s876, 1

</llo_original>
